<compile_context>
chip_gen: v5e
topology: v5e:2x2
jax: 0.10.0
libtpu: 0.0.40
codegen_flags: <defaults>
</compile_context>

<pallas_src>
import math
from functools import partial

import jax
import jax.numpy as jnp
from jax.experimental import pallas as pl
from jax.experimental.pallas import tpu as pltpu


def _lff_kernel(x_ref, b_ref, bias_ref, out_ref):
    # x_ref:    (TM, K)  VMEM   K = pack * in_dim   (pack tokens per row)
    # b_ref:    (K,  N)  VMEM   block-diagonal copy of 2*pi*[B | B]
    # bias_ref: (1,  N)  VMEM   ([0]*half + [pi/2]*half) tiled `pack` times
    # out_ref:  (TM, N)  VMEM   N = pack * out_dim  (multiple of 128 when packed)
    #
    # cos(z) == sin(z + pi/2): a single sin over the full-width projection
    # replaces sin + cos + concat (one EUP stream, no concat materialization,
    # one lane-dense full-width store).
    proj = jnp.dot(x_ref[...], b_ref[...], preferred_element_type=jnp.float32)
    out_ref[...] = jnp.sin(proj + bias_ref[...]).astype(out_ref.dtype)


def _round_up(n, m):
    return ((n + m - 1) // m) * m


@partial(jax.jit, static_argnames=("block_rows", "out_dtype"))
def learnable_fourier_features(x, B_mat, *, block_rows=1024, out_dtype=jnp.float32):
    """
    x:     (batch, seq, in_dim)          float32
    B_mat: (in_dim, output_dim // 2)     float32
    returns (batch, seq, output_dim)     out_dtype (float32 matches the module)
    """
    batch, seq, in_dim = x.shape
    half = B_mat.shape[1]
    out_dim = 2 * half
    M = batch * seq

    # ---- Fold 2*pi into B; fuse cos as a phase-shifted sin -----------------
    B2 = (2.0 * math.pi) * jnp.concatenate([B_mat, B_mat], axis=1)   # (in_dim, out_dim)
    bias = jnp.concatenate(
        [jnp.zeros((half,), jnp.float32),
         jnp.full((half,), 0.5 * math.pi, jnp.float32)])             # (out_dim,)

    # ---- Lane-dense packing factor -----------------------------------------
    if out_dim <= 128 and 128 % out_dim == 0:
        pack = 128 // out_dim        # e.g. out_dim=32 -> 4 tokens per 128 lanes
    else:
        pack = 1                     # out_dim already lane-wide (or awkward)
    K = pack * in_dim
    N = pack * out_dim

    if pack > 1:
        # Block-diagonal B so each packed token only contracts with its own
        # features:  b_dense[p*in_dim+d, q*out_dim+j] = (p==q) * B2[d, j]
        eye = jnp.eye(pack, dtype=jnp.float32)
        b_dense = (eye[:, None, :, None] * B2[None, :, None, :]).reshape(K, N)
        bias_dense = jnp.tile(bias, pack).reshape(1, N)
    else:
        b_dense = B2
        bias_dense = bias.reshape(1, N)

    # ---- Row handling: zero-copy when M % (8*pack) == 0 (typical for grids);
    # only odd M pays for the pad + output slice copies. --------------------
    M_pad = _round_up(M, 8 * pack)
    x2d = x.reshape(M, in_dim)
    if M_pad != M:
        x2d = jnp.pad(x2d, ((0, M_pad - M), (0, 0)))
    rows = M_pad // pack
    x_dense = x2d.reshape(rows, K)   # contiguous row-major view: free

    # ---- Tile rows: multiple of 8 sublanes, aim for >= 8 grid steps, cap so
    # the double-buffered footprint stays a few MiB on every generation. -----
    tm = max(8, min(block_rows, _round_up(pl.cdiv(rows, 8), 8)))
    grid = (pl.cdiv(rows, tm),)

    out_dense = pl.pallas_call(
        _lff_kernel,
        out_shape=jax.ShapeDtypeStruct((rows, N), out_dtype),
        grid=grid,
        in_specs=[
            pl.BlockSpec((tm, K), lambda i: (i, 0)),
            pl.BlockSpec((K, N), lambda i: (0, 0)),
            pl.BlockSpec((1, N), lambda i: (0, 0)),
        ],
        out_specs=pl.BlockSpec((tm, N), lambda i: (i, 0)),
        compiler_params=pltpu.CompilerParams(
            dimension_semantics=("parallel",)),
    )(x_dense, b_dense, bias_dense)

    out2d = out_dense.reshape(M_pad, out_dim)   # free bitcast of the dense slab
    if M_pad != M:
        out2d = out2d[:M]
    return out2d.reshape(batch, seq, out_dim)


def reference(x, B_mat):
    proj = 2.0 * math.pi * jnp.einsum("bnd,dk->bnk", x, B_mat)
    return jnp.concatenate([jnp.sin(proj), jnp.cos(proj)], axis=-1)


if __name__ == "__main__":
    # Module config (mirrors torch.randn(input_dim, output_dim // 2) * sigma).
    input_dim = 4
    output_dim = 32      # must be even
    sigma = 10.0
    batch, seq = 2, 8

    key = jax.random.PRNGKey(0)
    kx, kb = jax.random.split(key)
    x = jax.random.normal(kx, (batch, seq, input_dim), dtype=jnp.float32)
    B_mat = sigma * jax.random.normal(
        kb, (input_dim, output_dim // 2), dtype=jnp.float32
    )

    out = learnable_fourier_features(x, B_mat)
    out = jax.block_until_ready(out)

    ref = reference(x, B_mat)
    assert out.shape == (batch, seq, output_dim)
    # cos folded as sin(z + pi/2): with sigma=10 the arguments reach a few
    # hundred, so the phase add costs ~ulp(|z|) ~ 5e-5 of argument error.
    assert jnp.allclose(out, ref, atol=5e-4, rtol=5e-4), float(
        jnp.max(jnp.abs(out - ref))
    )

    print("KERNEL_OK")
</pallas_src>

<mosaic_0001>
module attributes {stable_mosaic.version = 11 : i64} {
  func.func @_lff_kernel(%arg0: i32, %arg1: memref<8x16xf32, #tpu.memory_space<vmem>>, %arg2: memref<16x128xf32, #tpu.memory_space<vmem>>, %arg3: memref<1x128xf32, #tpu.memory_space<vmem>>, %arg4: memref<8x128xf32, #tpu.memory_space<vmem>>) attributes {dimension_semantics = [#tpu.dimension_semantics<parallel>], iteration_bounds = array<i64: 1>, scalar_prefetch = 0 : i64, scratch_operands = 0 : i64, tpu.core_type = #tpu.core_type<tc>, window_params = [{transform_indices = @transform_0, window_bounds = array<i64: 8, 16>}, {pipeline_mode = #tpu.pipeline_mode<synchronous>, transform_indices = @transform_1, window_bounds = array<i64: 16, 128>}, {pipeline_mode = #tpu.pipeline_mode<synchronous>, transform_indices = @transform_2, window_bounds = array<i64: 1, 128>}, {transform_indices = @transform_3, window_bounds = array<i64: 8, 128>}]} {
    %c0 = arith.constant 0 : index
    %c0_0 = arith.constant 0 : index
    %0 = vector.load %arg1[%c0, %c0_0] : memref<8x16xf32, #tpu.memory_space<vmem>>, vector<8x16xf32>
    %c0_1 = arith.constant 0 : index
    %c0_2 = arith.constant 0 : index
    %1 = vector.load %arg2[%c0_1, %c0_2] : memref<16x128xf32, #tpu.memory_space<vmem>>, vector<16x128xf32>
    %cst = arith.constant dense<0.000000e+00> : vector<8x128xf32>
    %2 = tpu.matmul %0, %1, %cst {dimension_numbers = #tpu.dot_dimension_numbers<[1], [0], [0], [1], [0, 0, 1, 1], [], []>} : vector<8x16xf32>, vector<16x128xf32>, vector<8x128xf32> -> vector<8x128xf32>
    %c0_3 = arith.constant 0 : index
    %c0_4 = arith.constant 0 : index
    %3 = vector.load %arg3[%c0_3, %c0_4] : memref<1x128xf32, #tpu.memory_space<vmem>>, vector<1x128xf32>
    %4 = vector.broadcast %3 : vector<1x128xf32> to vector<8x128xf32>
    %5 = arith.addf %2, %4 : vector<8x128xf32>
    %6 = math.sin %5 : vector<8x128xf32>
    %c0_5 = arith.constant 0 : index
    %c0_6 = arith.constant 0 : index
    %7 = vector.load %arg4[%c0_5, %c0_6] : memref<8x128xf32, #tpu.memory_space<vmem>>, vector<8x128xf32>
    tpu.vector_store %arg4[%c0_5, %c0_6], %6 {strides = array<i32>} : memref<8x128xf32, #tpu.memory_space<vmem>>, vector<8x128xf32>,
    return
  }
  func.func @transform_0(%arg0: i32) -> (i32, i32) {
    %c0_i32 = arith.constant 0 : i32
    %c0_i32_0 = arith.constant 0 : i32
    return %arg0, %c0_i32 : i32, i32
  }
  func.func @transform_1(%arg0: i32) -> (i32, i32) {
    %c0_i32 = arith.constant 0 : i32
    %c0_i32_0 = arith.constant 0 : i32
    %c0_i32_1 = arith.constant 0 : i32
    return %c0_i32, %c0_i32_0 : i32, i32
  }
  func.func @transform_2(%arg0: i32) -> (i32, i32) {
    %c0_i32 = arith.constant 0 : i32
    %c0_i32_0 = arith.constant 0 : i32
    %c0_i32_1 = arith.constant 0 : i32
    return %c0_i32, %c0_i32_0 : i32, i32
  }
  func.func @transform_3(%arg0: i32) -> (i32, i32) {
    %c0_i32 = arith.constant 0 : i32
    %c0_i32_0 = arith.constant 0 : i32
    return %arg0, %c0_i32 : i32, i32
  }
}

</mosaic_0001>

<llo_original>
// kernel: tile.6
$region0: #{tile.6}
  #allocation0 [shape = 's32[1]{0}', space=sflag, size = 0x4, scoped, tag = 'scoped memory for tile.6']
  %s0 = inlined_call_operand.vmem [shape: f32[32], index: 0, kind: input, shape index: {}]
  %s1 = inlined_call_operand.vmem [shape: f32[4,32], index: 1, kind: output, shape index: {}]
  // Predicated region
  $region2: #{tile.6} parent=0 // pred_check
    _
  $region3: #{tile.6} parent=0 // pred_check_branch
    %3 = sbr.rel (0) target = $region5
  $region4: #{tile.6} parent=0 // pred_region
    _
  $region5: #{tile.6} parent=0 // pred_fallthru
    _
  %v4 = vld [vmem:[%s0] ss:$0 sm:$0xff]
  %5 = vst [vmem:[%s1] sm:$0xf] %v4

// kernel: tile.7
$region0: #{tile.7}
  %s0 = inlined_call_operand.vmem [shape: f32[4,32], index: 0, kind: input, shape index: {}]
  %s1 = inlined_call_operand.vmem [shape: f32[1,128], index: 1, kind: output, shape index: {}]
  $region1: #{tile.7} parent=0
    #allocation0 [shape = 'u8[4096]{0}', space=vmem, size = 0x1000, scoped, tag = 'scoped mem for output reshape']
    #allocation1 [shape = 'u8[4096]{0}', space=vmem, size = 0x1000, scoped, tag = 'scoped mem for input reshape']
    %s3 = ssub.s32 16, 1
    %v4 = vld [vmem:[%s0] sm:%s3]
    %5 = vst [vmem:[#allocation1] sm:%s3] %v4
    %v6 = vld [vmem:[#allocation1] sm:$0x1]
    %vm7 = vcmask 261120
    %8 = vst.msk [vmem:[#allocation0] sm:$0x1] %vm7, %v6
    %s9 = scalar_lea.vmem [#allocation1], 3
    %v10 = vld [vmem:[%s9] sm:$0x1]
    %11 = vrot.lane.b32.xlu0 %v10, 96
    %v12 = vpop.permute.xlu0 %11
    %vm13 = vcmask 1048320
    %14 = vst.msk [vmem:[#allocation0] sm:$0x1] %vm13, %v12
    %s15 = scalar_lea.vmem [#allocation1], 2
    %v16 = vld [vmem:[%s15] sm:$0x1]
    %17 = vrot.lane.b32.xlu0 %v16, 64
    %v18 = vpop.permute.xlu0 %17
    %vm19 = vcmask 785920
    %20 = vst.msk [vmem:[#allocation0] sm:$0x1] %vm19, %v18
    %s21 = scalar_lea.vmem [#allocation1], 1
    %v22 = vld [vmem:[%s21] sm:$0x1]
    %23 = vrot.lane.b32.xlu0 %v22, 32
    %v24 = vpop.permute.xlu0 %23
    %vm25 = vcmask 523520
    %26 = vst.msk [vmem:[#allocation0] sm:$0x1] %vm25, %v24
    %s28 = ssub.s32 2, 1
    %v29 = vld [vmem:[#allocation0] sm:%s28]
    %s31 = ssub.s32 2, 1
    %32 = vst [vmem:[%s1] sm:%s31] %v29

// kernel: learnable_fourier_features.1
$region0: #{learnable_fourier_features.1}
  #allocation0 [shape = 'u32[]', space=smem, size = 0x4, offset = 0x4, fixed_abs, tag = 'smem constant byte address 0x4 - core index']
  #allocation1 [shape = 'u32[72,128]{1,0:T(1,128)}', space=vmem, size = 0x9000, scoped, tag = 'internal scratch']
  %s0 = inlined_call_operand.vmem [shape: f32[8,16], index: 0, kind: input, shape index: {}]
  %s1 = inlined_call_operand.vmem [shape: f32[16,128], index: 1, kind: input, shape index: {}]
  %s2 = inlined_call_operand.vmem [shape: f32[1,128], index: 2, kind: input, shape index: {}]
  %s3 = inlined_call_operand.vmem [shape: f32[8,128], index: 3, kind: output, shape index: {}]
  %s4 = sld [smem:[#allocation0]]
  $region22: #{learnable_fourier_features.1} parent=0
    _
  %s6 = ssub.s32 1, %s4
  %s7 = scalar_select 0, %s6, %s4
  // Predicated region
  $region2: #{learnable_fourier_features.1} parent=0 // pred_check
    _
  $region3: #{learnable_fourier_features.1} parent=0 // pred_check_branch
    %9 = sbr.rel (0) target = $region5
  $region4: #{learnable_fourier_features.1} parent=0 // pred_region
    _
  $region5: #{learnable_fourier_features.1} parent=0 // pred_fallthru
    _
  // Predicated region
  $region6: #{learnable_fourier_features.1} parent=0 // pred_check
    _
  $region7: #{learnable_fourier_features.1} parent=0 // pred_check_branch
    %11 = sbr.rel (0) target = $region9
  $region8: #{learnable_fourier_features.1} parent=0 // pred_region
    _
  $region9: #{learnable_fourier_features.1} parent=0 // pred_fallthru
    _
  // Predicated region
  $region10: #{learnable_fourier_features.1} parent=0 // pred_check
    _
  $region11: #{learnable_fourier_features.1} parent=0 // pred_check_branch
    %13 = sbr.rel (0) target = $region13
  $region12: #{learnable_fourier_features.1} parent=0 // pred_region
    _
  $region13: #{learnable_fourier_features.1} parent=0 // pred_fallthru
    _
  %v14 = vld [vmem:[%s0] sm:$0xff]
  %v15 = vld [vmem:[%s1] sm:$0xff]
  %v16 = vld [vmem:[%s1 + $0x8] sm:$0xff]
  %v17 = vld [vmem:[%s2] sm:$0x1]
  %v19 = vperm.slane %v17, 0
  %vm21 = vcmask 130048
  %v23 = vsel %vm21, %v14, 0
  %25 = vmatpush.msra.mxu0 0.0
  %26 = vmatpush.msra.mxu0 0.0
  %27 = vmatpush.msra.mxu0 0.0
  %28 = vmatpush.msra.mxu0 0.0
  %29 = vmatpush.msra.mxu0 0.0
  %30 = vmatpush.msra.mxu0 0.0
  %31 = vmatpush.msra.mxu0 0.0
  %32 = vmatpush.msra.mxu0 0.0
  %33 = vmatpush.msra.mxu0 0.0
  %34 = vmatpush.msra.mxu0 0.0
  %35 = vmatpush.msra.mxu0 0.0
  %36 = vmatpush.msra.mxu0 0.0
  %37 = vmatpush.msra.mxu0 0.0
  %38 = vmatpush.msra.mxu0 0.0
  %39 = vmatpush.msra.mxu0 %v16
  %40 = vmatpush.msra.mxu0 %v15
  %41 = vmatmul.f32.gmra.mxu0 %v23
  %v42 = vpop.f32.mrf.mxu0
  %v43 = vadd.f32 %v19, %v42
  %44 = vdwg.mxu0
  %v45 = vand.u32 2147483647, %v43
  %vm46 = vcmp.le.f32.partialorder %v45, 0.7853982
  %vm47 = vcmp.lt.s32.totalorder %v43, 0
  %v48 = vand.u32 %v43, 2139095040
  %v49 = vshrl.u32 %v48, 23
  %v50 = vsub.s32 %v49, 127
  %v51 = vand.u32 2147483647, %v43
  %v52 = vand.u32 %v51, 8388607
  %v53 = vor.u32 %v52, 8388608
  %v54 = vsub.s32 0, %v53
  %v55 = vadd.s32 %v50, 1
  %vm56 = vcmp.gt.s32.totalorder %v55, 0
  %v57 = vsel %vm56, %v55, 0
  %v58 = vshrl.u32 %v57, 5
  %v59 = vand.u32 %v57, 31
  %v60 = vsub.s32 32, %v59
  %v61 = vshrl.u32 683565275, %v60
  %v62 = vshll.u32 683565275, %v59
  %v63 = vshrl.u32 2475754826, %v60
  %v64 = vor.u32 %v62, %v63
  %v65 = vshll.u32 2475754826, %v59
  %v66 = vshrl.u32 2131351028, %v60
  %v67 = vor.u32 %v65, %v66
  %v68 = vshll.u32 2131351028, %v59
  %v69 = vshrl.u32 2102212464, %v60
  %v70 = vor.u32 %v68, %v69
  %v71 = vshll.u32 2102212464, %v59
  %v72 = vshrl.u32 920167782, %v60
  %v73 = vor.u32 %v71, %v72
  %v74 = vshll.u32 920167782, %v59
  %v75 = vshrl.u32 1326507024, %v60
  %v76 = vor.u32 %v74, %v75
  %vm77 = vcmp.lt.s32.totalorder %v58, 1
  %vm78 = vcmp.lt.s32.totalorder %v58, 2
  %vm79 = vcmp.lt.s32.totalorder %v58, 3
  %vm80 = vcmp.lt.s32.totalorder %v58, 4
  %v81 = vsel %vm77, %v61, %v64
  %v82 = vsel %vm80, %v70, 2102212464
  %v83 = vsel %vm79, %v67, %v82
  %v84 = vsel %vm78, %v81, %v83
  %v85 = vsel %vm77, %v64, %v67
  %v86 = vsel %vm80, %v73, 920167782
  %v87 = vsel %vm79, %v70, %v86
  %v88 = vsel %vm78, %v85, %v87
  %v89 = vsel %vm77, %v67, %v70
  %v90 = vsel %vm80, %v76, 1326507024
  %v91 = vsel %vm79, %v73, %v90
  %v92 = vsel %vm78, %v89, %v91
  %v93 = vshll.u32 %v53, 8
  %v94 = vand.u32 %v93, 65535
  %v95 = vshrl.u32 %v93, 16
  %v96 = vand.u32 %v92, 65535
  %v97 = vshrl.u32 %v92, 16
  %v98 = vmul.u32 %v94, %v96
  %v99 = vmul.u32 %v94, %v97
  %v100 = vmul.u32 %v95, %v96
  %v101 = vmul.u32 %v95, %v97
  %v102 = vshll.u32 %v99, 16
  %v103 = vshrl.u32 %v99, 16
  %v104 = vshll.u32 %v100, 16
  %v105 = vshrl.u32 %v100, 16
  %vm106 = vc.u32 %v98, %v102
  %v107 = vsel %vm106, 1, 0
  %v108 = vadd.s32 %v98, %v102
  %v109 = vadd.s32 %v101, %v107
  %vm110 = vc.u32 %v108, %v104
  %v111 = vsel %vm110, 1, 0
  %v112 = vadd.s32 %v108, %v104
  %v113 = vadd.s32 %v109, %v111
  %v114 = vadd.s32 %v113, %v103
  %v115 = vadd.s32 %v114, %v105
  %v116 = vand.u32 %v93, 65535
  %v117 = vshrl.u32 %v93, 16
  %v118 = vand.u32 %v88, 65535
  %v119 = vshrl.u32 %v88, 16
  %v120 = vmul.u32 %v116, %v118
  %v121 = vmul.u32 %v116, %v119
  %v122 = vmul.u32 %v117, %v118
  %v123 = vmul.u32 %v117, %v119
  %v124 = vshll.u32 %v121, 16
  %v125 = vshrl.u32 %v121, 16
  %v126 = vshll.u32 %v122, 16
  %v127 = vshrl.u32 %v122, 16
  %vm128 = vc.u32 %v120, %v124
  %v129 = vsel %vm128, 1, 0
  %v130 = vadd.s32 %v120, %v124
  %v131 = vadd.s32 %v123, %v129
  %vm132 = vc.u32 %v130, %v126
  %v133 = vsel %vm132, 1, 0
  %v134 = vadd.s32 %v130, %v126
  %v135 = vadd.s32 %v131, %v133
  %v136 = vadd.s32 %v135, %v125
  %v137 = vadd.s32 %v136, %v127
  %v138 = vmul.u32 %v93, %v84
  %v139 = vadd.s32 %v115, %v134
  %vm140 = vc.u32 %v115, %v134
  %v141 = vadd.s32 %v137, 1
  %v142 = vsel %vm140, %v141, %v137
  %v143 = vadd.s32 %v138, %v142
  %v144 = vadd.s32 %v143, 536870912
  %v145 = vshrl.u32 %v144, 30
  %v146 = vshll.u32 %v145, 30
  %v147 = vsub.s32 %v143, %v146
  %vm148 = vcmp.lt.s32.totalorder %v147, 0
  %v149 = vsub.s32 0, %v147
  %v150 = vsel %vm148, %v149, %v147
  %v151 = vclz %v150
  %v152 = vsub.s32 %v151, 2
  %vm153 = vcmp.gt.s32.totalorder 0, %v152
  %v154 = vsel %vm153, 0, %v152
  %v155 = vsub.s32 32, %v154
  %v156 = vshll.u32 %v147, %v154
  %v157 = vshrl.u32 %v139, %v155
  %v158 = vor.u32 %v156, %v157
  %v159 = vsub.s32 4294967266, %v154
  %v160 = vadd.s32 %v159, 127
  %v161 = vshll.u32 %v160, 23
  %v162 = vor.u32 4788187, %v161
  %v163 = vand.u32 2147483647, %v162
  %v165 = vcvt.s32.f32 %v158
  %v166 = vmul.f32 %v165, %v163
  %v167 = vxor.u32 %v166, 2147483648
  %v168 = vsel %vm47, %v167, %v166
  %v169 = vsub.s32 4, %v145
  %v170 = vsel %vm47, %v169, %v145
  %v171 = vsel %vm46, %v43, %v168
  %v172 = vsel %vm46, 0, %v170
  %v173 = vmul.f32 %v171, %v171
  %v174 = vmul.f32 %v173, -0.001358992
  %v175 = vadd.f32 %v174, 0.041655596
  %v176 = vmul.f32 %v173, %v175
  %v177 = vadd.f32 %v176, -0.4999988
  %v178 = vmul.f32 %v173, %v177
  %v179 = vadd.f32 1.0, %v178
  %v180 = vmul.f32 %v171, %v171
  %v181 = vmul.f32 %v180, -0.00019511016
  %v182 = vadd.f32 %v181, 0.008332121
  %v183 = vmul.f32 %v180, %v182
  %v184 = vadd.f32 %v183, -0.16666654
  %v185 = vmul.f32 %v180, %v184
  %v186 = vadd.f32 %v185, 1.0
  %v187 = vmul.f32 %v186, %v171
  %vm188 = vweird.f32 %v43
  %v189 = vadd.s32 %v172, 3
  %v190 = vand.u32 %v189, 3
  %vm191 = vcmp.lt.s32.totalorder %v190, 2
  %vm192 = vcmp.eq.s32.totalorder %v190, 0
  %v193 = vxor.u32 %v187, 2147483648
  %v194 = vsel %vm192, %v179, %v193
  %vm195 = vcmp.eq.s32.totalorder %v190, 2
  %v196 = vxor.u32 %v179, 2147483648
  %v197 = vsel %vm195, %v196, %v187
  %v198 = vsel %vm191, %v194, %v197
  %v199 = vsel %vm188, nan, %v198
  %200 = vst [vmem:[%s3] sm:$0xff] %v199
  // Predicated region
  $region14: #{learnable_fourier_features.1} parent=0 // pred_check
    _
  $region15: #{learnable_fourier_features.1} parent=0 // pred_check_branch
    %202 = sbr.rel (0) target = $region17
  $region16: #{learnable_fourier_features.1} parent=0 // pred_region
    _
  $region17: #{learnable_fourier_features.1} parent=0 // pred_fallthru
    _
  // Predicated region
  $region18: #{learnable_fourier_features.1} parent=0 // pred_check
    _
  $region19: #{learnable_fourier_features.1} parent=0 // pred_check_branch
    %204 = sbr.rel (0) target = $region21
  $region20: #{learnable_fourier_features.1} parent=0 // pred_region
    _
  $region21: #{learnable_fourier_features.1} parent=0 // pred_fallthru
    _

</llo_original>
